<compile_context>
chip_gen: v6e
topology: v6e:2x2x1
jax: 0.10.0
libtpu: 0.0.40
codegen_flags: <defaults>
</compile_context>

<pallas_src>
import functools
import math

import jax
import jax.numpy as jnp
from jax.experimental import pallas as pl
from jax.experimental.pallas import tpu as pltpu


# Explicit scoped-VMEM limit: comfortably under v7x's 64 MiB physical VMEM and
# well within v5e/v6e's 128 MiB; raised above the 16/32 MiB defaults.
_VMEM_LIMIT_BYTES = 48 * 1024 * 1024
# Target ~4 MiB per block: measured f32 streams hit the ~85% HBM-roofline
# plateau at 512+ row (>=1 MiB) tiles; 4 MiB amortizes the ~0.35 us/step grid
# overhead further while keeping the pipeline footprint small.
_TARGET_BLOCK_BYTES = 4 * 1024 * 1024
# LayerNorm pipeline holds ~4 block-sized buffers (double-buffered in + out).
_LN_BUFFERS_PER_BLOCK = 4


def _layernorm_kernel(x_ref, g_ref, b_ref, o_ref, *, eps):
    # Compute in f32 even if I/O is bf16 (v5e has no bf16 VPU).
    x = x_ref[...].astype(jnp.float32)                 # (TR, H)
    h = x.shape[-1]
    mean = jnp.mean(x, axis=-1, keepdims=True)         # (TR, 1)
    xc = x - mean
    # torch.std default is unbiased (divisor H-1); eps is added to std, not var.
    var = jnp.sum(xc * xc, axis=-1, keepdims=True) * (1.0 / (h - 1))
    # Per-row reciprocal (full precision: approx reciprocal could exceed 1e-4
    # tolerance), then cheap broadcast multiply instead of TRxH divides.
    inv = 1.0 / (jnp.sqrt(var) + eps)                  # (TR, 1)
    g = g_ref[...].astype(jnp.float32)                 # (1, H)
    b = b_ref[...].astype(jnp.float32)                 # (1, H)
    o_ref[...] = (g * (xc * inv) + b).astype(o_ref.dtype)


def _choose_block_rows(rows, hidden, itemsize):
    """Pick a row-block size by bytes, bounded by the VMEM budget."""
    row_bytes = hidden * itemsize
    # Size by bytes (bandwidth), not by a fixed row cap.
    br = _TARGET_BLOCK_BYTES // row_bytes
    # Keep the double-buffered pipeline footprint well under the scoped limit.
    vmem_cap = (_VMEM_LIMIT_BYTES // 2) // (_LN_BUFFERS_PER_BLOCK * row_bytes)
    br = min(br, max(16, vmem_cap))
    # Keep >=2 grid steps at large shapes so both v7x TensorCores get work.
    br = min(br, max(16, pl.cdiv(rows, 2)))
    # Multiple of 16 rows: satisfies the 8-sublane rule for f32 and bf16 packing.
    br = max(16, (br // 16) * 16)
    if rows <= br:
        return rows                 # single full-extent block (always legal)
    return br


def layer_norm(x2, gamma2, beta2, *, eps):
    rows, hidden = x2.shape
    block_rows = _choose_block_rows(rows, hidden, x2.dtype.itemsize)
    # cdiv: a partial tail block is padded/masked by Pallas, never dropped.
    grid = (pl.cdiv(rows, block_rows),)
    return pl.pallas_call(
        functools.partial(_layernorm_kernel, eps=eps),
        out_shape=jax.ShapeDtypeStruct((rows, hidden), x2.dtype),
        grid=grid,
        in_specs=[
            pl.BlockSpec((block_rows, hidden), lambda i: (i, 0)),
            pl.BlockSpec((1, hidden), lambda i: (0, 0)),
            pl.BlockSpec((1, hidden), lambda i: (0, 0)),
        ],
        out_specs=pl.BlockSpec((block_rows, hidden), lambda i: (i, 0)),
        compiler_params=pltpu.CompilerParams(
            dimension_semantics=("parallel",),
            vmem_limit_bytes=_VMEM_LIMIT_BYTES,
        ),
    )(x2, gamma2, beta2)


def sublayer_connection(x, gamma, beta, sublayer, *, eps=1e-6):
    """x: (..., H); sublayer: arbitrary JAX callable mapping (..., H) -> (..., H)."""
    shape = x.shape
    hidden = shape[-1]
    rows = math.prod(shape[:-1])

    x2 = x.reshape(rows, hidden)
    normed = layer_norm(x2, gamma.reshape(1, hidden), beta.reshape(1, hidden), eps=eps)
    y = sublayer(normed.reshape(shape))

    # Residual add in plain JAX so XLA fuses it into the sublayer's epilogue
    # (avoids an extra full HBM round-trip for y via a standalone Pallas add).
    # Dropout is identity in eval/inference mode.
    # TODO(synk): training-mode dropout (random mask + 1/(1-p) scaling) not implemented.
    return x + y


if __name__ == "__main__":
    # Small shapes: batch=2, seq=8, hidden=128 (multiple of 128 -> lane-dense stores).
    B, S, H = 2, 8, 128
    EPS = 1e-6

    key = jax.random.PRNGKey(0)
    k_x, k_w, k_b = jax.random.split(key, 3)

    x = jax.random.normal(k_x, (B, S, H), dtype=jnp.float32)
    gamma = jnp.ones((H,), dtype=jnp.float32)    # LayerNorm.a_2 init
    beta = jnp.zeros((H,), dtype=jnp.float32)    # LayerNorm.b_2 init

    # Representative sublayer (the PyTorch module takes an arbitrary callable):
    # a small linear projection followed by GELU, in plain JAX.
    w = jax.random.normal(k_w, (H, H), dtype=jnp.float32) / math.sqrt(H)
    bias = jax.random.normal(k_b, (H,), dtype=jnp.float32) * 0.02

    def sublayer(h):
        return jax.nn.gelu(h @ w + bias)

    out = sublayer_connection(x, gamma, beta, sublayer, eps=EPS)
    out = jax.block_until_ready(out)

    # Pure-JAX reference mirroring the PyTorch forward (eval-mode dropout = identity).
    mean = x.mean(-1, keepdims=True)
    var = jnp.sum((x - mean) ** 2, axis=-1, keepdims=True) / (H - 1)   # unbiased std
    std = jnp.sqrt(var)
    normed_ref = gamma * (x - mean) / (std + EPS) + beta
    ref = x + sublayer(normed_ref)

    assert out.shape == (B, S, H)
    assert jnp.allclose(out, ref, atol=1e-4, rtol=1e-4), "mismatch vs reference"

    print("KERNEL_OK")
</pallas_src>

<mosaic_0001>
module attributes {stable_mosaic.version = 11 : i64} {
  func.func @_layernorm_kernel(%arg0: i32, %arg1: memref<16x128xf32, #tpu.memory_space<vmem>>, %arg2: memref<1x128xf32, #tpu.memory_space<vmem>>, %arg3: memref<1x128xf32, #tpu.memory_space<vmem>>, %arg4: memref<16x128xf32, #tpu.memory_space<vmem>>) attributes {dimension_semantics = [#tpu.dimension_semantics<parallel>], iteration_bounds = array<i64: 1>, scalar_prefetch = 0 : i64, scratch_operands = 0 : i64, tpu.core_type = #tpu.core_type<tc>, window_params = [{transform_indices = @transform_0, window_bounds = array<i64: 16, 128>}, {pipeline_mode = #tpu.pipeline_mode<synchronous>, transform_indices = @transform_1, window_bounds = array<i64: 1, 128>}, {pipeline_mode = #tpu.pipeline_mode<synchronous>, transform_indices = @transform_2, window_bounds = array<i64: 1, 128>}, {transform_indices = @transform_3, window_bounds = array<i64: 16, 128>}]} {
    %c0 = arith.constant 0 : index
    %c0_0 = arith.constant 0 : index
    %0 = vector.load %arg1[%c0, %c0_0] : memref<16x128xf32, #tpu.memory_space<vmem>>, vector<16x128xf32>
    %cst = arith.constant dense<0.000000e+00> : vector<16xf32>
    %1 = vector.multi_reduction <add>, %0, %cst [1] : vector<16x128xf32> to vector<16xf32>
    %2 = vector.shape_cast %1 : vector<16xf32> to vector<16x1xf32>
    %cst_1 = arith.constant 1.280000e+02 : f32
    %3 = vector.broadcast %cst_1 : f32 to vector<16x1xf32>
    %4 = arith.divf %2, %3 : vector<16x1xf32>
    %5 = vector.broadcast %4 : vector<16x1xf32> to vector<16x128xf32>
    %6 = arith.subf %0, %5 : vector<16x128xf32>
    %7 = arith.mulf %6, %6 : vector<16x128xf32>
    %cst_2 = arith.constant dense<0.000000e+00> : vector<16xf32>
    %8 = vector.multi_reduction <add>, %7, %cst_2 [1] : vector<16x128xf32> to vector<16xf32>
    %9 = vector.shape_cast %8 : vector<16xf32> to vector<16x1xf32>
    %cst_3 = arith.constant 0.00787401571 : f32
    %10 = vector.broadcast %cst_3 : f32 to vector<16x1xf32>
    %11 = arith.mulf %9, %10 : vector<16x1xf32>
    %12 = math.sqrt %11 : vector<16x1xf32>
    %cst_4 = arith.constant 9.99999997E-7 : f32
    %13 = vector.broadcast %cst_4 : f32 to vector<16x1xf32>
    %14 = arith.addf %12, %13 : vector<16x1xf32>
    %cst_5 = arith.constant 1.000000e+00 : f32
    %15 = vector.broadcast %cst_5 : f32 to vector<16x1xf32>
    %16 = arith.divf %15, %14 : vector<16x1xf32>
    %c0_6 = arith.constant 0 : index
    %c0_7 = arith.constant 0 : index
    %17 = vector.load %arg2[%c0_6, %c0_7] : memref<1x128xf32, #tpu.memory_space<vmem>>, vector<1x128xf32>
    %c0_8 = arith.constant 0 : index
    %c0_9 = arith.constant 0 : index
    %18 = vector.load %arg3[%c0_8, %c0_9] : memref<1x128xf32, #tpu.memory_space<vmem>>, vector<1x128xf32>
    %19 = vector.broadcast %16 : vector<16x1xf32> to vector<16x128xf32>
    %20 = arith.mulf %6, %19 : vector<16x128xf32>
    %21 = vector.broadcast %17 : vector<1x128xf32> to vector<16x128xf32>
    %22 = arith.mulf %21, %20 : vector<16x128xf32>
    %23 = vector.broadcast %18 : vector<1x128xf32> to vector<16x128xf32>
    %24 = arith.addf %22, %23 : vector<16x128xf32>
    %c0_10 = arith.constant 0 : index
    %c0_11 = arith.constant 0 : index
    %25 = vector.load %arg4[%c0_10, %c0_11] : memref<16x128xf32, #tpu.memory_space<vmem>>, vector<16x128xf32>
    tpu.vector_store %arg4[%c0_10, %c0_11], %24 {strides = array<i32>} : memref<16x128xf32, #tpu.memory_space<vmem>>, vector<16x128xf32>,
    return
  }
  func.func @transform_0(%arg0: i32) -> (i32, i32) {
    %c0_i32 = arith.constant 0 : i32
    %c0_i32_0 = arith.constant 0 : i32
    return %arg0, %c0_i32 : i32, i32
  }
  func.func @transform_1(%arg0: i32) -> (i32, i32) {
    %c0_i32 = arith.constant 0 : i32
    %c0_i32_0 = arith.constant 0 : i32
    %c0_i32_1 = arith.constant 0 : i32
    return %c0_i32, %c0_i32_0 : i32, i32
  }
  func.func @transform_2(%arg0: i32) -> (i32, i32) {
    %c0_i32 = arith.constant 0 : i32
    %c0_i32_0 = arith.constant 0 : i32
    %c0_i32_1 = arith.constant 0 : i32
    return %c0_i32, %c0_i32_0 : i32, i32
  }
  func.func @transform_3(%arg0: i32) -> (i32, i32) {
    %c0_i32 = arith.constant 0 : i32
    %c0_i32_0 = arith.constant 0 : i32
    return %arg0, %c0_i32 : i32, i32
  }
}

</mosaic_0001>

<llo_original>
// kernel: tpu_custom_call.1
$region0: #{tpu_custom_call.1}
  #allocation0 [shape = 'u32[]', space=smem, size = 0x4, offset = 0x4, fixed_abs, tag = 'smem constant byte address 0x4 - core index']
  #allocation1 [shape = 'u32[144,128]{1,0:T(1,128)}', space=vmem, size = 0x12000, scoped, tag = 'internal scratch']
  %s0 = inlined_call_operand.hbm [shape: f32[16,128], index: 0, kind: input, shape index: {}]
  %s1 = inlined_call_operand.vmem [shape: f32[1,128], index: 1, kind: input, shape index: {}]
  %s2 = inlined_call_operand.vmem [shape: f32[1,128], index: 2, kind: input, shape index: {}]
  %s3 = inlined_call_operand.hbm [shape: f32[16,128], index: 3, kind: output, shape index: {}]
  %s4 = sld [smem:[#allocation0]]
  $region26: #{tpu_custom_call.1} parent=0
    _
  %s6 = ssub.s32 1, %s4
  %s7 = scalar_select 0, %s6, %s4
  $region1: #{tpu_custom_call.1} parent=0
    #allocation2 [shape = 'u8[8192]{0}', space=vmem, size = 0x2000, scoped, tag = 'input window, operand 0, single buffered']
    #allocation3 [shape = 's32[1]{0}', space=sflag, size = 0x4, scoped, tag = 'scoped memory for tpu_custom_call.1']
    #allocation4 [shape = 's32[1]{0}', space=sflag, size = 0x4, scoped, tag = 'scoped memory for tpu_custom_call.1']
    #allocation5 [shape = 'u8[8192]{0}', space=vmem, size = 0x2000, scoped, tag = 'output window, operand 0, single buffered']
    %8 = vsyncpa [#allocation3], 0
    %9 = vsyncpa [#allocation4], 0
    // Predicated region
    $region2: #{tpu_custom_call.1} parent=1 // pred_check
      _
    $region3: #{tpu_custom_call.1} parent=1 // pred_check_branch
      %11 = sbr.rel (0) target = $region5
    $region4: #{tpu_custom_call.1} parent=1 // pred_region
      %s13 = ssub.s32 256, 256
      %14 = vsyncadd [#allocation3], %s13
      %s15 = sshll.u32 [#allocation2], 4
      %s16 = int_to_ptr.vmem [resolvable:$true] %s15
      %21 = dma.hbm_to_vmem [thread:$0]  %s0, 256, %s16, [#allocation3], 128, 128, 8
    $region5: #{tpu_custom_call.1} parent=1 // pred_fallthru
      _
    // Predicated region
    $region6: #{tpu_custom_call.1} parent=1 // pred_check
      _
    $region7: #{tpu_custom_call.1} parent=1 // pred_check_branch
      %23 = sbr.rel (0) target = $region9
    $region8: #{tpu_custom_call.1} parent=1 // pred_region
      _
    $region9: #{tpu_custom_call.1} parent=1 // pred_fallthru
      _
    // Predicated region
    $region10: #{tpu_custom_call.1} parent=1 // pred_check
      _
    $region11: #{tpu_custom_call.1} parent=1 // pred_check_branch
      %25 = sbr.rel (0) target = $region13
    $region12: #{tpu_custom_call.1} parent=1 // pred_region
      _
    $region13: #{tpu_custom_call.1} parent=1 // pred_fallthru
      _
    // Predicated region
    $region14: #{tpu_custom_call.1} parent=1 // pred_check
      _
    $region15: #{tpu_custom_call.1} parent=1 // pred_check_branch
      %27 = sbr.rel (0) target = $region17
    $region16: #{tpu_custom_call.1} parent=1 // pred_region
      %28 = dma.done [#allocation3], 256
    $region17: #{tpu_custom_call.1} parent=1 // pred_fallthru
      _
    %v29 = vld [vmem:[#allocation2] sm:$0xff]
    %v30 = vld [vmem:[#allocation2 + $0x8] sm:$0xff]
    %31 = vadd.xlane.f32.xlu0 %v29
    %v32 = vpop.xlane.xlu0 %31
    %33 = vadd.xlane.f32.xlu0 %v30
    %v34 = vpop.xlane.xlu0 %33
    %v35 = vrcp.pop 128.0
    %v36 = vmul.f32 %v32, %v35
    %v37 = vmul.f32 %v34, %v35
    %v38 = vsub.f32 %v29, %v36
    %v39 = vsub.f32 %v30, %v37
    %v40 = vmul.f32 %v38, %v38
    %v41 = vmul.f32 %v39, %v39
    %42 = vadd.xlane.f32.xlu0 %v40
    %v43 = vpop.xlane.xlu0 %42
    %44 = vadd.xlane.f32.xlu0 %v41
    %v45 = vpop.xlane.xlu0 %44
    %v46 = vmul.f32 %v43, 0.007874016
    %v47 = vmul.f32 %v45, 0.007874016
    %v48 = vrsqrt.pop %v46
    %v49 = vmul.f32 %v46, %v48
    %vm50 = vcmp.eq.f32.partialorder %v46, inf
    %v51 = vsel %vm50, %v46, %v49
    %vm52 = vcmp.eq.f32.partialorder %v46, 0.0
    %v53 = vand.u32 %v46, 2147483648
    %v54 = vsel %vm52, %v53, %v51
    %v55 = vrsqrt.pop %v47
    %v56 = vmul.f32 %v47, %v55
    %vm57 = vcmp.eq.f32.partialorder %v47, inf
    %v58 = vsel %vm57, %v47, %v56
    %vm59 = vcmp.eq.f32.partialorder %v47, 0.0
    %v60 = vand.u32 %v47, 2147483648
    %v61 = vsel %vm59, %v60, %v58
    %v62 = vadd.f32 %v54, 1e-06
    %v63 = vadd.f32 %v61, 1e-06
    %v64 = vrcp.pop %v62
    %v65 = vmul.f32 1.0, %v64
    %v66 = vrcp.pop %v63
    %v67 = vmul.f32 1.0, %v66
    %v68 = vld [vmem:[%s1] sm:$0x1]
    %v69 = vld [vmem:[%s2] sm:$0x1]
    %v70 = vmul.f32 %v38, %v65
    %v71 = vmul.f32 %v39, %v67
    %v73 = vlaneseq
    %v74 = vshrl.u32 %v73, 7
    %v75 = vsub.s32 0, %v74
    %v76 = vrot.slane %v68, %v75
    %v78 = vmul.f32 %v76, %v70
    %v79 = vmul.f32 %v76, %v71
    %v81 = vlaneseq
    %v82 = vshrl.u32 %v81, 7
    %v83 = vsub.s32 0, %v82
    %v84 = vrot.slane %v69, %v83
    %v86 = vadd.f32 %v78, %v84
    %v87 = vadd.f32 %v79, %v84
    %88 = vst [vmem:[#allocation5] sm:$0xff] %v86
    %89 = vst [vmem:[#allocation5 + $0x8] sm:$0xff] %v87
    // Predicated region
    $region18: #{tpu_custom_call.1} parent=1 // pred_check
      _
    $region19: #{tpu_custom_call.1} parent=1 // pred_check_branch
      %91 = sbr.rel (0) target = $region21
    $region20: #{tpu_custom_call.1} parent=1 // pred_region
      %s93 = ssub.s32 256, 256
      %94 = vsyncadd [#allocation4], %s93
      %s95 = sshll.u32 [#allocation5], 4
      %s96 = int_to_ptr.vmem [resolvable:$true] %s95
      %101 = dma.vmem_to_hbm [thread:$0]  %s96, 256, %s3, [#allocation4], 128, 128, 8
    $region21: #{tpu_custom_call.1} parent=1 // pred_fallthru
      _
    // Predicated region
    $region22: #{tpu_custom_call.1} parent=1 // pred_check
      _
    $region23: #{tpu_custom_call.1} parent=1 // pred_check_branch
      %103 = sbr.rel (0) target = $region25
    $region24: #{tpu_custom_call.1} parent=1 // pred_region
      %104 = dma.done [#allocation4], 256
    $region25: #{tpu_custom_call.1} parent=1 // pred_fallthru
      _
    %105 = vsyncpa [#allocation3], 1
    %106 = vsyncpa [#allocation4], 1

</llo_original>
